<compile_context>
chip_gen: v5e
topology: v5e:2x2
jax: 0.10.0
libtpu: 0.0.40
codegen_flags: <defaults>
</compile_context>

<pallas_src>
import functools

import jax
import jax.numpy as jnp
from jax.experimental import pallas as pl
from jax.experimental.pallas import tpu as pltpu


# ---------------------------------------------------------------------------
# VMEM budgeting helpers
# ---------------------------------------------------------------------------
def _vmem_capacity_bytes():
    """Physical VMEM of the attached chip (v5e/v6e: 128 MiB, v7x: 64 MiB),
    with a conservative fallback if the query is unavailable."""
    try:
        cap = getattr(pltpu.get_tpu_info(), "vmem_capacity_bytes", None)
        if cap:
            return int(cap)
    except Exception:
        pass
    return 64 << 20  # v7x physical VMEM: the tightest of the three generations


def _pick_batch_tile(batch, row_bytes, block_budget):
    """Largest multiple-of-8 batch tile dividing `batch` whose double-buffered
    blocks fit `block_budget`, preferring >=2 grid steps so the 'parallel'
    batch axis actually shards across v7x's two TensorCores."""
    max_rows = max(8, block_budget // max(1, 2 * row_bytes))  # 2x: double buffer
    divisors = [d for d in range(8, batch + 1, 8) if batch % d == 0]
    fitting = [d for d in divisors if d <= max_rows] or [8]
    multi_step = [d for d in fitting if batch // d >= 2]
    return max(multi_step) if multi_step else max(fitting)


# ---------------------------------------------------------------------------
# Labels kernel: the only elementwise compute in the forward pass.
# Mirrors the module verbatim:
#   labels_input_ids[decoder_attention_mask == pad_token_id] = -100
# (including its behaviour when pad_token_id != 0).
# ---------------------------------------------------------------------------
def _labels_kernel(t_ids, t_mask, labels_out, *, pad_token_id):
    labels_out[...] = jnp.where(t_mask[...] == jnp.int32(pad_token_id),
                                jnp.int32(-100), t_ids[...])


def compute_labels(t_ids, t_mask, pad_token_id):
    B, Lt = t_ids.shape
    itemsize = t_ids.dtype.itemsize
    # per batch row resident in VMEM: ids block + mask block + labels block
    row_bytes = 3 * itemsize * Lt

    vmem_cap = _vmem_capacity_bytes()
    vmem_limit = min(vmem_cap // 2, 64 << 20)   # explicit scoped-VMEM budget
    block_budget = vmem_limit // 2              # headroom for compiler scratch

    # Large batches not divisible by 8: pad to a multiple of 8 (cheap) instead
    # of a single mega-tile that kills pipelining / blows the VMEM scope.
    if B % 8 != 0 and 2 * B * row_bytes > block_budget:
        pad = (-B) % 8
        padded = compute_labels(
            jnp.pad(t_ids, ((0, pad), (0, 0))),
            jnp.pad(t_mask, ((0, pad), (0, 0))),
            pad_token_id)
        return padded[:B]

    if B % 8 != 0 or B < 16:
        tb = B  # tiny / odd batch: one full-array block, grid=(1,)
    else:
        tb = _pick_batch_tile(B, row_bytes, block_budget)

    # NOTE: labels keep the module's (B, Lt) shape; when Lt < 128 the trailing
    # stores are masked, but padding + re-slicing would just move the same copy
    # elsewhere, so the output shape is preserved.
    def _spec():
        return pl.BlockSpec((tb, Lt), lambda i: (i, 0))

    kernel = functools.partial(_labels_kernel, pad_token_id=pad_token_id)
    return pl.pallas_call(
        kernel,
        out_shape=jax.ShapeDtypeStruct((B, Lt), t_ids.dtype),
        grid=(B // tb,),
        in_specs=[_spec(), _spec()],
        out_specs=_spec(),
        compiler_params=pltpu.CompilerParams(
            dimension_semantics=("parallel",),
            vmem_limit_bytes=int(vmem_limit)),
    )(t_ids, t_mask)


# ---------------------------------------------------------------------------
# Forward pass (replacement of ModelEncoding.forward on pre-tokenized tensors)
# ---------------------------------------------------------------------------
def model_encoding_forward(question_enc, ocr_enc=None, target_enc=None,
                           pad_token_id=0):
    """question_enc / ocr_enc / target_enc are dicts of [B, L] int32 arrays
    with keys 'input_ids' and 'attention_mask' (already 'tokenized')."""
    # TODO(synk): the string->token-id tokenization itself (AutoTokenizer) has
    # no Pallas equivalent; inputs here are pre-tokenized integer tensors.
    if ocr_enc is not None:
        # Pure data movement (zero compute): per the perf review this is left
        # to XLA's copy engine instead of burning the kernel's vector-store
        # slot and VMEM footprint on it.
        encodings = {
            key: jnp.concatenate([question_enc[key], ocr_enc[key]], axis=1)
            for key in question_enc.keys()
        }
    else:
        encodings = dict(question_enc)
    if target_enc is not None:
        labels = compute_labels(target_enc["input_ids"],
                                target_enc["attention_mask"], pad_token_id)
        encodings.update({
            "labels": labels,
            "decoder_attention_mask": target_enc["attention_mask"],
        })
    return encodings


# ---------------------------------------------------------------------------
# Deterministic synthetic "tokenizer" outputs + test driver
# ---------------------------------------------------------------------------
def _fake_tokenize(key, batch, seq_len, pad_token_id=0, vocab=100):
    """Deterministic stand-in for tokenizer(...): ids in [1, vocab) with the
    tail of each sequence padded."""
    k_ids, k_len = jax.random.split(key)
    ids = jax.random.randint(k_ids, (batch, seq_len), 1, vocab, dtype=jnp.int32)
    lens = jax.random.randint(k_len, (batch,), 1, seq_len + 1, dtype=jnp.int32)
    pos = jnp.arange(seq_len, dtype=jnp.int32)[None, :]
    mask = (pos < lens[:, None]).astype(jnp.int32)
    ids = jnp.where(mask == 1, ids, jnp.int32(pad_token_id))
    return {"input_ids": ids, "attention_mask": mask}


def _reference(question_enc, ocr_enc, target_enc, pad_token_id):
    out = {key: jnp.concatenate([question_enc[key], ocr_enc[key]], axis=1)
           for key in question_enc}
    out["labels"] = jnp.where(target_enc["attention_mask"] == pad_token_id,
                              jnp.int32(-100), target_enc["input_ids"])
    out["decoder_attention_mask"] = target_enc["attention_mask"]
    return out


if __name__ == "__main__":
    pad_token_id = 0
    root = jax.random.PRNGKey(0)
    kq, ko, ka, kq2, ko2, ka2 = jax.random.split(root, 6)

    # Case 1: config-implied small shapes (batch=2, 8 question / 8 OCR / 8
    # answer tokens) -> single-block grid=(1,) labels kernel.
    q1 = _fake_tokenize(kq, 2, 8, pad_token_id)
    o1 = _fake_tokenize(ko, 2, 8, pad_token_id)
    t1 = _fake_tokenize(ka, 2, 8, pad_token_id)
    out1 = model_encoding_forward(q1, o1, t1, pad_token_id)
    out1 = jax.tree_util.tree_map(jax.block_until_ready, out1)
    ref1 = _reference(q1, o1, t1, pad_token_id)
    assert out1["input_ids"].shape == (2, 16)
    for k in ref1:
        assert jnp.array_equal(out1[k], ref1[k]), k

    # Case 2: lane-aligned, tiled path (batch=16, 128-token sequences) ->
    # multiple-of-8 batch tiles and >=2 grid steps on the "parallel" axis.
    q2 = _fake_tokenize(kq2, 16, 128, pad_token_id)
    o2 = _fake_tokenize(ko2, 16, 128, pad_token_id)
    t2 = _fake_tokenize(ka2, 16, 128, pad_token_id)
    out2 = model_encoding_forward(q2, o2, t2, pad_token_id)
    out2 = jax.tree_util.tree_map(jax.block_until_ready, out2)
    ref2 = _reference(q2, o2, t2, pad_token_id)
    for k in ref2:
        assert jnp.array_equal(out2[k], ref2[k]), k

    # Exercise the ocr-only / target-only branches once for coverage.
    out3 = model_encoding_forward(q1, o1, None, pad_token_id)
    out4 = model_encoding_forward(q1, None, t1, pad_token_id)
    jax.tree_util.tree_map(jax.block_until_ready, (out3, out4))
    assert jnp.array_equal(out3["input_ids"], ref1["input_ids"])
    assert jnp.array_equal(out4["labels"], ref1["labels"])
    assert jnp.array_equal(out4["input_ids"], q1["input_ids"])

    print("KERNEL_OK")
</pallas_src>

<mosaic_0001>
module attributes {stable_mosaic.version = 11 : i64} {
  func.func @_labels_kernel(%arg0: i32, %arg1: memref<2x8xi32, #tpu.memory_space<vmem>>, %arg2: memref<2x8xi32, #tpu.memory_space<vmem>>, %arg3: memref<2x8xi32, #tpu.memory_space<vmem>>) attributes {dimension_semantics = [#tpu.dimension_semantics<parallel>], iteration_bounds = array<i64: 1>, scalar_prefetch = 0 : i64, scratch_operands = 0 : i64, tpu.core_type = #tpu.core_type<tc>, window_params = [{transform_indices = @transform_0, window_bounds = array<i64: 2, 8>}, {transform_indices = @transform_1, window_bounds = array<i64: 2, 8>}, {transform_indices = @transform_2, window_bounds = array<i64: 2, 8>}]} {
    %c0 = arith.constant 0 : index
    %c0_0 = arith.constant 0 : index
    %0 = vector.load %arg2[%c0, %c0_0] : memref<2x8xi32, #tpu.memory_space<vmem>>, vector<2x8xi32>
    %c0_i32 = arith.constant 0 : i32
    %1 = vector.broadcast %c0_i32 : i32 to vector<2x8xi32>
    %2 = arith.cmpi eq, %0, %1 : vector<2x8xi32>
    %c0_1 = arith.constant 0 : index
    %c0_2 = arith.constant 0 : index
    %3 = vector.load %arg1[%c0_1, %c0_2] : memref<2x8xi32, #tpu.memory_space<vmem>>, vector<2x8xi32>
    %c-100_i32 = arith.constant -100 : i32
    %4 = vector.broadcast %c-100_i32 : i32 to vector<2x8xi32>
    %5 = arith.select %2, %4, %3 : vector<2x8xi1>, vector<2x8xi32>
    %c0_3 = arith.constant 0 : index
    %c0_4 = arith.constant 0 : index
    %6 = vector.load %arg3[%c0_3, %c0_4] : memref<2x8xi32, #tpu.memory_space<vmem>>, vector<2x8xi32>
    tpu.vector_store %arg3[%c0_3, %c0_4], %5 {strides = array<i32>} : memref<2x8xi32, #tpu.memory_space<vmem>>, vector<2x8xi32>,
    return
  }
  func.func @transform_0(%arg0: i32) -> (i32, i32) {
    %c0_i32 = arith.constant 0 : i32
    %c0_i32_0 = arith.constant 0 : i32
    return %arg0, %c0_i32 : i32, i32
  }
  func.func @transform_1(%arg0: i32) -> (i32, i32) {
    %c0_i32 = arith.constant 0 : i32
    %c0_i32_0 = arith.constant 0 : i32
    return %arg0, %c0_i32 : i32, i32
  }
  func.func @transform_2(%arg0: i32) -> (i32, i32) {
    %c0_i32 = arith.constant 0 : i32
    %c0_i32_0 = arith.constant 0 : i32
    return %arg0, %c0_i32 : i32, i32
  }
}

</mosaic_0001>

<llo_original>
// kernel: tpu_custom_call.1
$region0: #{tpu_custom_call.1}
  #allocation0 [shape = 'u32[]', space=smem, size = 0x4, offset = 0x4, fixed_abs, tag = 'smem constant byte address 0x4 - core index']
  #allocation1 [shape = 'u32[72,128]{1,0:T(1,128)}', space=vmem, size = 0x9000, scoped, tag = 'internal scratch']
  %s0 = inlined_call_operand.hbm [shape: s32[2,8], index: 0, kind: input, shape index: {}]
  %s1 = inlined_call_operand.hbm [shape: s32[2,8], index: 1, kind: input, shape index: {}]
  %s2 = inlined_call_operand.hbm [shape: s32[2,8], index: 2, kind: output, shape index: {}]
  %s3 = sld [smem:[#allocation0]]
  $region26: #{tpu_custom_call.1} parent=0
    _
  %s5 = ssub.s32 1, %s3
  %s6 = scalar_select 0, %s5, %s3
  $region1: #{tpu_custom_call.1} parent=0
    #allocation2 [shape = 'u8[1024]{0}', space=vmem, size = 0x400, scoped, tag = 'input window, operand 0, single buffered']
    #allocation3 [shape = 's32[1]{0}', space=sflag, size = 0x4, scoped, tag = 'scoped memory for tpu_custom_call.1']
    #allocation4 [shape = 's32[1]{0}', space=sflag, size = 0x4, scoped, tag = 'scoped memory for tpu_custom_call.1']
    #allocation5 [shape = 'u8[1024]{0}', space=vmem, size = 0x400, scoped, tag = 'input window, operand 1, single buffered']
    #allocation6 [shape = 's32[1]{0}', space=sflag, size = 0x4, scoped, tag = 'scoped memory for tpu_custom_call.1']
    #allocation7 [shape = 'u8[1024]{0}', space=vmem, size = 0x400, scoped, tag = 'output window, operand 0, single buffered']
    %7 = vsyncpa [#allocation3], 0
    %8 = vsyncpa [#allocation6], 0
    %9 = vsyncpa [#allocation4], 0
    // Predicated region
    $region2: #{tpu_custom_call.1} parent=1 // pred_check
      _
    $region3: #{tpu_custom_call.1} parent=1 // pred_check_branch
      %11 = sbr.rel (0) target = $region5
    $region4: #{tpu_custom_call.1} parent=1 // pred_region
      %13 = vsyncadd [#allocation3], 0
      %s15 = sshll.u32 %s0, 4
      %s16 = int_to_ptr.hbm [resolvable:$true] %s15
      %s17 = sshll.u32 [#allocation2], 4
      %s18 = int_to_ptr.vmem [resolvable:$true] %s17
      %20 = dma.hbm_to_vmem [thread:$0]  %s16, 32, %s18, [#allocation3]
    $region5: #{tpu_custom_call.1} parent=1 // pred_fallthru
      _
    // Predicated region
    $region6: #{tpu_custom_call.1} parent=1 // pred_check
      _
    $region7: #{tpu_custom_call.1} parent=1 // pred_check_branch
      %22 = sbr.rel (0) target = $region9
    $region8: #{tpu_custom_call.1} parent=1 // pred_region
      %24 = vsyncadd [#allocation6], 0
      %s26 = sshll.u32 %s1, 4
      %s27 = int_to_ptr.hbm [resolvable:$true] %s26
      %s28 = sshll.u32 [#allocation5], 4
      %s29 = int_to_ptr.vmem [resolvable:$true] %s28
      %31 = dma.hbm_to_vmem [thread:$0]  %s27, 32, %s29, [#allocation6]
    $region9: #{tpu_custom_call.1} parent=1 // pred_fallthru
      _
    // Predicated region
    $region10: #{tpu_custom_call.1} parent=1 // pred_check
      _
    $region11: #{tpu_custom_call.1} parent=1 // pred_check_branch
      %33 = sbr.rel (0) target = $region13
    $region12: #{tpu_custom_call.1} parent=1 // pred_region
      %35 = dma.done [#allocation3], 32
    $region13: #{tpu_custom_call.1} parent=1 // pred_fallthru
      _
    // Predicated region
    $region14: #{tpu_custom_call.1} parent=1 // pred_check
      _
    $region15: #{tpu_custom_call.1} parent=1 // pred_check_branch
      %37 = sbr.rel (0) target = $region17
    $region16: #{tpu_custom_call.1} parent=1 // pred_region
      %39 = dma.done [#allocation6], 32
    $region17: #{tpu_custom_call.1} parent=1 // pred_fallthru
      _
    %v40 = vld [vmem:[#allocation5] sm:$0x3]
    %vm41 = vcmp.eq.s32.totalorder %v40, 0
    %v42 = vld [vmem:[#allocation2] sm:$0x3]
    %v43 = vsel %vm41, 4294967196, %v42
    %vm44 = vcmask 58368
    %45 = vst.msk [vmem:[#allocation7] sm:$0x3] %vm44, %v43
    // Predicated region
    $region18: #{tpu_custom_call.1} parent=1 // pred_check
      _
    $region19: #{tpu_custom_call.1} parent=1 // pred_check_branch
      %47 = sbr.rel (0) target = $region21
    $region20: #{tpu_custom_call.1} parent=1 // pred_region
      %49 = vsyncadd [#allocation4], 0
      %s51 = sshll.u32 [#allocation7], 4
      %s52 = int_to_ptr.vmem [resolvable:$true] %s51
      %s53 = sshll.u32 %s2, 4
      %s54 = int_to_ptr.hbm [resolvable:$true] %s53
      %56 = dma.vmem_to_hbm [thread:$0]  %s52, 32, %s54, [#allocation4]
    $region21: #{tpu_custom_call.1} parent=1 // pred_fallthru
      _
    // Predicated region
    $region22: #{tpu_custom_call.1} parent=1 // pred_check
      _
    $region23: #{tpu_custom_call.1} parent=1 // pred_check_branch
      %58 = sbr.rel (0) target = $region25
    $region24: #{tpu_custom_call.1} parent=1 // pred_region
      %60 = dma.done [#allocation4], 32
    $region25: #{tpu_custom_call.1} parent=1 // pred_fallthru
      _
    %61 = vsyncpa [#allocation3], 1
    %62 = vsyncpa [#allocation6], 1
    %63 = vsyncpa [#allocation4], 1

</llo_original>
